<compile_context>
chip_gen: v7x
topology: tpu7x:2x2x1
jax: 0.10.0
libtpu: 0.0.40
codegen_flags: <defaults>
</compile_context>

<pallas_src>
import math

import jax
import jax.numpy as jnp
from jax.experimental import pallas as pl
from jax.experimental.pallas import tpu as pltpu


def _gaussian_emb_kernel(x_ref, w_ref, b_ref, o_ref):
    # x_ref: (TM, pack*C)   w_ref: (pack*C, pack*emb)   b_ref: (1, pack*emb)
    # o_ref: (TM, pack*emb)
    xv = x_ref[...].astype(jnp.float32)                   # cast in-kernel (free for f32)
    proj = jnp.dot(xv, w_ref[...], preferred_element_type=jnp.float32)
    o_ref[...] = jnp.sin(proj + b_ref[...]).astype(o_ref.dtype)


def _fold_weights(bvals, *, num_shapes, eps, skip_normalization, pack):
    """Fold normalization, eps, 2*pi and the sin/cos split into one weight + bias."""
    bvals = bvals.astype(jnp.float32)
    e2, c = bvals.shape
    two_pi = 2.0 * math.pi
    row_sum = jnp.sum(bvals, axis=1)                      # sum_c bvals[e, c], shape (e2,)
    if skip_normalization:
        a = two_pi * bvals.T                              # (C, e2)
        bias0 = two_pi * eps * row_sum                    # (e2,)
    else:
        a = (2.0 * two_pi / (num_shapes - 1)) * bvals.T   # (C, e2)
        bias0 = two_pi * (eps - 1.0) * row_sum            # (e2,)
    # cos(t) = sin(t + pi/2): duplicate columns, shift the bias of the cos half.
    w_row = jnp.concatenate([a, a], axis=1)                                   # (C, emb)
    b_row = jnp.concatenate([bias0, bias0 + jnp.float32(math.pi / 2.0)], 0)   # (emb,)
    if pack == 1:
        return w_row.astype(jnp.float32), b_row[None, :].astype(jnp.float32)
    # Block-diagonal weight packs `pack` source rows into one lane-dense output row.
    w = jnp.kron(jnp.eye(pack, dtype=jnp.float32), w_row)        # (pack*C, pack*emb)
    b = jnp.tile(b_row, pack)[None, :]                           # (1, pack*emb)
    return w.astype(jnp.float32), b.astype(jnp.float32)


def _choose_pack(emb_size, in_channels):
    """Smallest pack making pack*emb a multiple of 128, capped to keep kron small."""
    pack = 128 // math.gcd(emb_size, 128)
    if pack > 1 and pack * in_channels > 512:
        pack = 1                              # huge kron weight not worth it
    return pack


def gaussian_embedding(x, bvals, *, num_shapes, eps=1e-4, skip_normalization=False,
                       out_dtype=None, target_out_tile_bytes=4 << 20):
    """x: (..., in_channels); bvals: (emb_size//2, in_channels). Returns (..., emb_size)."""
    x = jnp.asarray(x)
    in_channels = x.shape[-1]
    e2 = bvals.shape[0]
    emb_size = 2 * e2
    lead_shape = x.shape[:-1]
    out_dtype = jnp.float32 if out_dtype is None else out_dtype

    pack = _choose_pack(emb_size, in_channels)

    # Keep x in its native dtype; cast happens inside the kernel.
    x2d = x.reshape(-1, in_channels)
    n = x2d.shape[0]

    # Pack rows: (n, C) -> (n/pack, pack*C). Pad n to a multiple of pack only if needed
    # (at most pack-1 extra rows; no full-array trim copy later beyond a cheap slice).
    n_pack = pl.cdiv(n, pack) * pack
    if n_pack != n:
        x2d = jnp.pad(x2d, ((0, n_pack - n), (0, 0)))
    rows = n_pack // pack
    cin = pack * in_channels
    cout = pack * emb_size                   # multiple of 128 whenever pack > 1
    xp = x2d.reshape(rows, cin)              # row-major -> free view

    in_isz = jnp.dtype(x.dtype).itemsize
    out_isz = jnp.dtype(out_dtype).itemsize

    def working_set(t):
        # double-buffered input + output DMA tiles, f32 matmul/sin intermediate,
        # double-buffered (resident) weight + bias.
        return (2 * t * cin * in_isz
                + 2 * t * cout * out_isz
                + t * cout * 4
                + 2 * (cin * cout + cout) * 4)

    # --- Row-tile sizing (packed rows). Output tile targets ~4 MiB so per-step DMA
    #     amortizes the ~0.35us grid-step overhead on every generation.
    tm = max(target_out_tile_bytes // (cout * out_isz), 8)
    # Keep >=2 (ideally >=4) grid steps so the pipeline runs and v7x can shard the
    # parallel axis across its two TensorCores.
    if rows >= 32:
        min_grid = 4
    elif rows >= 16:
        min_grid = 2
    else:
        min_grid = 1
    tm = min(tm, pl.cdiv(rows, min_grid))
    tm = max((tm // 8) * 8, 8)
    # VMEM budget (safe for v7x's 64 MiB physical VMEM; generous for v5e/v6e 128 MiB).
    vmem_budget = 40 << 20
    while tm > 8 and working_set(tm) > vmem_budget:
        tm = max(((tm // 2) // 8) * 8, 8)
    if tm >= rows:
        tm = rows                            # tiny input: single full-extent block
    grid_rows = pl.cdiv(rows, tm)            # partial final block handled by Pallas

    w, bias = _fold_weights(bvals, num_shapes=num_shapes, eps=eps,
                            skip_normalization=skip_normalization, pack=pack)

    vmem_limit = int(min(48 << 20, max(32 << 20, working_set(tm) + (8 << 20))))

    cost = pl.CostEstimate(
        flops=2 * rows * cin * cout,
        transcendentals=rows * cout,
        bytes_accessed=rows * cin * in_isz + rows * cout * out_isz
                       + (cin * cout + cout) * 4,
    )

    out = pl.pallas_call(
        _gaussian_emb_kernel,
        out_shape=jax.ShapeDtypeStruct((rows, cout), out_dtype),
        grid_spec=pltpu.PrefetchScalarGridSpec(
            num_scalar_prefetch=0,
            grid=(grid_rows,),
            in_specs=[
                pl.BlockSpec((tm, cin), lambda i: (i, 0)),     # row tile of packed input
                pl.BlockSpec((cin, cout), lambda i: (0, 0)),   # folded weights, resident
                pl.BlockSpec((1, cout), lambda i: (0, 0)),     # folded bias, resident
            ],
            out_specs=pl.BlockSpec((tm, cout), lambda i: (i, 0)),
        ),
        compiler_params=pltpu.CompilerParams(
            dimension_semantics=("parallel",),   # shardable across v7x's 2 TensorCores
            vmem_limit_bytes=vmem_limit,
        ),
        cost_estimate=cost,
    )(xp, w, bias)

    out2d = out.reshape(n_pack, emb_size)    # free row-major view back to (N, emb)
    if n_pack != n:
        out2d = out2d[:n]                    # only when the tiny pack-pad was required
    return out2d.reshape(*lead_shape, emb_size)


def gaussian_embedding_ref(x, bvals, *, num_shapes, eps=1e-4, skip_normalization=False):
    """Pure-JAX reference matching the PyTorch forward exactly (un-folded math)."""
    x = x.astype(jnp.float32)
    if not skip_normalization:
        x = 2.0 * (x / (num_shapes - 1)) - 1.0
    x = x + eps
    proj = 2.0 * jnp.pi * jnp.einsum("...c,ec->...e", x, bvals.astype(jnp.float32))
    return jnp.concatenate([jnp.sin(proj), jnp.cos(proj)], axis=-1)


if __name__ == "__main__":
    # Module hyperparameters (small, consistent with the forward pass).
    in_channels = 4
    num_shapes = 8
    emb_size = 32          # -> bvals: (16, 4)
    scale = 10
    eps = 1e-4

    key = jax.random.PRNGKey(0)
    k_b, k_x = jax.random.split(key)

    # Parameter init mirrors torch.normal(0, 1, (emb_size//2, in_channels)) * scale.
    bvals = jax.random.normal(k_b, (emb_size // 2, in_channels), dtype=jnp.float32) * scale

    # Input: batch=2, seq=8 strokes, in_channels=4 -> output (2, 8, 32).
    x = jax.random.uniform(
        k_x, (2, 8, in_channels), dtype=jnp.float32, minval=0.0, maxval=num_shapes - 1.0
    )

    # sin/cos of O(100) arguments amplify f32 matmul rounding (~1e-7 relative in the
    # argument -> few-e-5 .. few-e-4 absolute in the output), so compare with a
    # tolerance appropriate for that, not 1e-5.
    TOL = 2e-3

    # Normalized path.
    out = gaussian_embedding(x, bvals, num_shapes=num_shapes, eps=eps)
    out = jax.block_until_ready(out)
    ref = gaussian_embedding_ref(x, bvals, num_shapes=num_shapes, eps=eps)
    assert out.shape == (2, 8, emb_size), out.shape
    err = float(jnp.max(jnp.abs(out - ref)))
    assert err < TOL, err

    # skip_normalization path.
    out_s = gaussian_embedding(x, bvals, num_shapes=num_shapes, eps=eps,
                               skip_normalization=True)
    out_s = jax.block_until_ready(out_s)
    ref_s = gaussian_embedding_ref(x, bvals, num_shapes=num_shapes, eps=eps,
                                   skip_normalization=True)
    err_s = float(jnp.max(jnp.abs(out_s - ref_s)))
    assert err_s < TOL, err_s

    # Larger case to exercise the multi-step row grid / partial final block path.
    xl = jax.random.uniform(
        jax.random.PRNGKey(1), (3, 1111, in_channels), dtype=jnp.float32,
        minval=0.0, maxval=num_shapes - 1.0
    )
    out_l = jax.block_until_ready(
        gaussian_embedding(xl, bvals, num_shapes=num_shapes, eps=eps)
    )
    ref_l = gaussian_embedding_ref(xl, bvals, num_shapes=num_shapes, eps=eps)
    err_l = float(jnp.max(jnp.abs(out_l - ref_l)))
    assert out_l.shape == (3, 1111, emb_size), out_l.shape
    assert err_l < TOL, err_l

    print("KERNEL_OK")
</pallas_src>

<mosaic_0001>
module attributes {stable_mosaic.version = 11 : i64} {
  func.func @_gaussian_emb_kernel(%arg0: i32, %arg1: memref<4x16xf32, #tpu.memory_space<vmem>>, %arg2: memref<16x128xf32, #tpu.memory_space<vmem>>, %arg3: memref<1x128xf32, #tpu.memory_space<vmem>>, %arg4: memref<4x128xf32, #tpu.memory_space<vmem>>) attributes {dimension_semantics = [#tpu.dimension_semantics<parallel>], iteration_bounds = array<i64: 1>, scalar_prefetch = 0 : i64, scratch_operands = 0 : i64, tpu.core_type = #tpu.core_type<tc>, window_params = [{transform_indices = @transform_0, window_bounds = array<i64: 4, 16>}, {pipeline_mode = #tpu.pipeline_mode<synchronous>, transform_indices = @transform_1, window_bounds = array<i64: 16, 128>}, {pipeline_mode = #tpu.pipeline_mode<synchronous>, transform_indices = @transform_2, window_bounds = array<i64: 1, 128>}, {transform_indices = @transform_3, window_bounds = array<i64: 4, 128>}]} {
    %c0 = arith.constant 0 : index
    %c0_0 = arith.constant 0 : index
    %0 = vector.load %arg1[%c0, %c0_0] : memref<4x16xf32, #tpu.memory_space<vmem>>, vector<4x16xf32>
    %c0_1 = arith.constant 0 : index
    %c0_2 = arith.constant 0 : index
    %1 = vector.load %arg2[%c0_1, %c0_2] : memref<16x128xf32, #tpu.memory_space<vmem>>, vector<16x128xf32>
    %cst = arith.constant dense<0.000000e+00> : vector<4x128xf32>
    %2 = tpu.matmul %0, %1, %cst {dimension_numbers = #tpu.dot_dimension_numbers<[1], [0], [0], [1], [0, 0, 1, 1], [], []>} : vector<4x16xf32>, vector<16x128xf32>, vector<4x128xf32> -> vector<4x128xf32>
    %c0_3 = arith.constant 0 : index
    %c0_4 = arith.constant 0 : index
    %3 = vector.load %arg3[%c0_3, %c0_4] : memref<1x128xf32, #tpu.memory_space<vmem>>, vector<1x128xf32>
    %4 = vector.broadcast %3 : vector<1x128xf32> to vector<4x128xf32>
    %5 = arith.addf %2, %4 : vector<4x128xf32>
    %6 = math.sin %5 : vector<4x128xf32>
    %c0_5 = arith.constant 0 : index
    %c0_6 = arith.constant 0 : index
    %7 = vector.load %arg4[%c0_5, %c0_6] : memref<4x128xf32, #tpu.memory_space<vmem>>, vector<4x128xf32>
    tpu.vector_store %arg4[%c0_5, %c0_6], %6 {strides = array<i32>} : memref<4x128xf32, #tpu.memory_space<vmem>>, vector<4x128xf32>,
    return
  }
  func.func @transform_0(%arg0: i32) -> (i32, i32) {
    %c0_i32 = arith.constant 0 : i32
    %c0_i32_0 = arith.constant 0 : i32
    return %arg0, %c0_i32 : i32, i32
  }
  func.func @transform_1(%arg0: i32) -> (i32, i32) {
    %c0_i32 = arith.constant 0 : i32
    %c0_i32_0 = arith.constant 0 : i32
    %c0_i32_1 = arith.constant 0 : i32
    return %c0_i32, %c0_i32_0 : i32, i32
  }
  func.func @transform_2(%arg0: i32) -> (i32, i32) {
    %c0_i32 = arith.constant 0 : i32
    %c0_i32_0 = arith.constant 0 : i32
    %c0_i32_1 = arith.constant 0 : i32
    return %c0_i32, %c0_i32_0 : i32, i32
  }
  func.func @transform_3(%arg0: i32) -> (i32, i32) {
    %c0_i32 = arith.constant 0 : i32
    %c0_i32_0 = arith.constant 0 : i32
    return %arg0, %c0_i32 : i32, i32
  }
}

</mosaic_0001>

<llo_original>
// kernel: tpu_custom_call.1
$region0: #{tpu_custom_call.1}
  #allocation0 [shape = 'u32[]', space=smem, size = 0x4, offset = 0x4, fixed_abs, tag = 'smem constant byte address 0x4 - core index']
  #allocation1 [shape = 'u32[144,128]{1,0:T(1,128)}', space=vmem, size = 0x12000, scoped, tag = 'internal scratch']
  %s0 = inlined_call_operand.hbm [shape: f32[4,16], index: 0, kind: input, shape index: {}]
  %s1 = inlined_call_operand.hbm [shape: f32[16,128], index: 1, kind: input, shape index: {}]
  %s2 = inlined_call_operand.vmem [shape: f32[1,128], index: 2, kind: input, shape index: {}]
  %s3 = inlined_call_operand.hbm [shape: f32[4,128], index: 3, kind: output, shape index: {}]
  %s4 = sld [smem:[#allocation0]]
  $region30: #{tpu_custom_call.1} parent=0
    _
  %s6 = ssub.s32 1, %s4
  %s7 = scalar_select 0, %s6, %s4
  $region1: #{tpu_custom_call.1} parent=0
    #allocation2 [shape = 'u8[2048]{0}', space=vmem, size = 0x800, scoped, tag = 'input window, operand 0, single buffered']
    #allocation3 [shape = 's32[1]{0}', space=sflag, size = 0x4, scoped, tag = 'scoped memory for tpu_custom_call.1']
    #allocation4 [shape = 's32[1]{0}', space=sflag, size = 0x4, scoped, tag = 'scoped memory for tpu_custom_call.1']
    #allocation5 [shape = 'u8[8192]{0}', space=vmem, size = 0x2000, scoped, tag = 'input window, operand 1, single buffered']
    #allocation6 [shape = 's32[1]{0}', space=sflag, size = 0x4, scoped, tag = 'scoped memory for tpu_custom_call.1']
    #allocation7 [shape = 'u8[2048]{0}', space=vmem, size = 0x800, scoped, tag = 'output window, operand 0, single buffered']
    %8 = vsyncpa [#allocation3], 0
    %9 = vsyncpa [#allocation6], 0
    %10 = vsyncpa [#allocation4], 0
    // Predicated region
    $region2: #{tpu_custom_call.1} parent=1 // pred_check
      _
    $region3: #{tpu_custom_call.1} parent=1 // pred_check_branch
      %12 = sbr.rel (0) target = $region5
    $region4: #{tpu_custom_call.1} parent=1 // pred_region
      %s14 = ssub.s32 64, 64
      %15 = vsyncadd [#allocation3], %s14
      %s17 = sshll.u32 [#allocation2], 4
      %s18 = int_to_ptr.vmem [resolvable:$true] %s17
      %20 = dma.hbm_to_vmem [thread:$0]  %s0, 64, %s18, [#allocation3]
    $region5: #{tpu_custom_call.1} parent=1 // pred_fallthru
      _
    // Predicated region
    $region6: #{tpu_custom_call.1} parent=1 // pred_check
      _
    $region7: #{tpu_custom_call.1} parent=1 // pred_check_branch
      %22 = sbr.rel (0) target = $region9
    $region8: #{tpu_custom_call.1} parent=1 // pred_region
      %s24 = ssub.s32 256, 256
      %25 = vsyncadd [#allocation6], %s24
      %s26 = sshll.u32 [#allocation5], 4
      %s27 = int_to_ptr.vmem [resolvable:$true] %s26
      %32 = dma.hbm_to_vmem [thread:$0]  %s1, 256, %s27, [#allocation6], 128, 128, 8
    $region9: #{tpu_custom_call.1} parent=1 // pred_fallthru
      _
    // Predicated region
    $region10: #{tpu_custom_call.1} parent=1 // pred_check
      _
    $region11: #{tpu_custom_call.1} parent=1 // pred_check_branch
      %34 = sbr.rel (0) target = $region13
    $region12: #{tpu_custom_call.1} parent=1 // pred_region
      _
    $region13: #{tpu_custom_call.1} parent=1 // pred_fallthru
      _
    // Predicated region
    $region14: #{tpu_custom_call.1} parent=1 // pred_check
      _
    $region15: #{tpu_custom_call.1} parent=1 // pred_check_branch
      %36 = sbr.rel (0) target = $region17
    $region16: #{tpu_custom_call.1} parent=1 // pred_region
      %37 = dma.done [#allocation3], 64
    $region17: #{tpu_custom_call.1} parent=1 // pred_fallthru
      _
    // Predicated region
    $region18: #{tpu_custom_call.1} parent=1 // pred_check
      _
    $region19: #{tpu_custom_call.1} parent=1 // pred_check_branch
      %39 = sbr.rel (0) target = $region21
    $region20: #{tpu_custom_call.1} parent=1 // pred_region
      %40 = dma.done [#allocation6], 256
    $region21: #{tpu_custom_call.1} parent=1 // pred_fallthru
      _
    %v41 = vld [vmem:[#allocation2] sm:$0xf]
    %v42 = vld [vmem:[#allocation5] sm:$0xff]
    %v43 = vld [vmem:[#allocation5 + $0x8] sm:$0xff]
    %v44 = vld [vmem:[%s2] sm:$0x1]
    %v46 = vlaneseq
    %v47 = vshrl.u32 %v46, 7
    %v48 = vsub.s32 0, %v47
    %v49 = vrot.slane %v44, %v48
    %vm51 = vcmask 130048
    %v53 = vsel %vm51, %v41, 0
    %55 = vmatprep.subr.mxu0 0.0
    %56 = vmatpush1.msra.mxu0 %v42
    %57 = vmatprep.subr.mxu0 0.0
    %58 = vmatpush1.msra.mxu0 %v43
    %59 = vmatprep.subr.mxu0 0.0
    %60 = vmatpush1.msra.mxu0 0.0
    %61 = vmatprep.subr.mxu0 0.0
    %62 = vmatpush1.msra.mxu0 0.0
    %63 = vmatprep.subr.mxu0 0.0
    %64 = vmatpush1.msra.mxu0 0.0
    %65 = vmatprep.subr.mxu0 0.0
    %66 = vmatpush1.msra.mxu0 0.0
    %67 = vmatprep.subr.mxu0 0.0
    %68 = vmatpush1.msra.mxu0 0.0
    %69 = vmatprep.subr.mxu0 0.0
    %70 = vmatpush1.msra.mxu0 0.0
    %71 = vmatprep.subr.mxu0 0.0
    %72 = vmatpush1.msra.mxu0 0.0
    %73 = vmatprep.subr.mxu0 0.0
    %74 = vmatpush1.msra.mxu0 0.0
    %75 = vmatprep.subr.mxu0 0.0
    %76 = vmatpush1.msra.mxu0 0.0
    %77 = vmatprep.subr.mxu0 0.0
    %78 = vmatpush1.msra.mxu0 0.0
    %79 = vmatprep.subr.mxu0 0.0
    %80 = vmatpush1.msra.mxu0 0.0
    %81 = vmatprep.subr.mxu0 0.0
    %82 = vmatpush1.msra.mxu0 0.0
    %83 = vmatprep.subr.mxu0 0.0
    %84 = vmatpush1.msra.mxu0 0.0
    %85 = vmatprep.subr.mxu0 0.0
    %86 = vmatpush1.msra.mxu0 0.0
    %87 = vmatprep.subr.mxu0 0.0
    %88 = vmatpush1.msra.mxu0 0.0
    %89 = vmatprep.subr.mxu0 0.0
    %90 = vmatpush1.msra.mxu0 0.0
    %91 = vmatprep.subr.mxu0 0.0
    %92 = vmatpush1.msra.mxu0 0.0
    %93 = vmatprep.subr.mxu0 0.0
    %94 = vmatpush1.msra.mxu0 0.0
    %95 = vmatprep.subr.mxu0 0.0
    %96 = vmatpush1.msra.mxu0 0.0
    %97 = vmatprep.subr.mxu0 0.0
    %98 = vmatpush1.msra.mxu0 0.0
    %99 = vmatprep.subr.mxu0 0.0
    %100 = vmatpush1.msra.mxu0 0.0
    %101 = vmatprep.subr.mxu0 0.0
    %102 = vmatpush1.msra.mxu0 0.0
    %103 = vmatprep.subr.mxu0 0.0
    %104 = vmatpush1.msra.mxu0 0.0
    %105 = vmatprep.subr.mxu0 0.0
    %106 = vmatpush1.msra.mxu0 0.0
    %107 = vmatprep.subr.mxu0 0.0
    %108 = vmatpush1.msra.mxu0 0.0
    %109 = vmatprep.subr.mxu0 0.0
    %110 = vmatpush1.msra.mxu0 0.0
    %111 = vmatprep.subr.mxu0 0.0
    %112 = vmatpush1.msra.mxu0 0.0
    %113 = vmatprep.subr.mxu0 0.0
    %114 = vmatpush1.msra.mxu0 0.0
    %115 = vmatprep.subr.mxu0 0.0
    %116 = vmatpush1.msra.mxu0 0.0
    %117 = vmatprep.subr.mxu0 0.0
    %118 = vmatpush1.msra.mxu0 0.0
    %119 = vmatprep.mubr.f32.mxu0 0.0
    %120 = vmatmul.mubr.f32.gmra.mrb[0].mxu0 %v53
    %v121 = vpop.f32.mrb[0].mxu0
    %v122 = vadd.f32 %v49, %v121
    %v123 = vpop.f32.mrb[0].mxu0
    %124 = vdwg.mxu0
    %v125 = vand.u32 2147483647, %v122
    %vm126 = vcmp.le.f32.partialorder %v125, 0.7853982
    %vm127 = vcmp.lt.s32.totalorder %v122, 0
    %v128 = vand.u32 %v122, 2139095040
    %v129 = vshrl.u32 %v128, 23
    %v130 = vsub.s32 %v129, 127
    %v131 = vand.u32 2147483647, %v122
    %v132 = vand.u32 %v131, 8388607
    %v133 = vor.u32 %v132, 8388608
    %v134 = vsub.s32 0, %v133
    %v135 = vadd.s32 %v130, 1
    %vm136 = vcmp.gt.s32.totalorder %v135, 0
    %v137 = vsel %vm136, %v135, 0
    %v138 = vshrl.u32 %v137, 5
    %v139 = vand.u32 %v137, 31
    %v140 = vsub.s32 32, %v139
    %v141 = vshrl.u32 683565275, %v140
    %v142 = vshll.u32 683565275, %v139
    %v143 = vshrl.u32 2475754826, %v140
    %v144 = vor.u32 %v142, %v143
    %v145 = vshll.u32 2475754826, %v139
    %v146 = vshrl.u32 2131351028, %v140
    %v147 = vor.u32 %v145, %v146
    %v148 = vshll.u32 2131351028, %v139
    %v149 = vshrl.u32 2102212464, %v140
    %v150 = vor.u32 %v148, %v149
    %v151 = vshll.u32 2102212464, %v139
    %v152 = vshrl.u32 920167782, %v140
    %v153 = vor.u32 %v151, %v152
    %v154 = vshll.u32 920167782, %v139
    %v155 = vshrl.u32 1326507024, %v140
    %v156 = vor.u32 %v154, %v155
    %vm157 = vcmp.lt.s32.totalorder %v138, 1
    %vm158 = vcmp.lt.s32.totalorder %v138, 2
    %vm159 = vcmp.lt.s32.totalorder %v138, 3
    %vm160 = vcmp.lt.s32.totalorder %v138, 4
    %v161 = vsel %vm157, %v141, %v144
    %v162 = vsel %vm160, %v150, 2102212464
    %v163 = vsel %vm159, %v147, %v162
    %v164 = vsel %vm158, %v161, %v163
    %v165 = vsel %vm157, %v144, %v147
    %v166 = vsel %vm160, %v153, 920167782
    %v167 = vsel %vm159, %v150, %v166
    %v168 = vsel %vm158, %v165, %v167
    %v169 = vsel %vm157, %v147, %v150
    %v170 = vsel %vm160, %v156, 1326507024
    %v171 = vsel %vm159, %v153, %v170
    %v172 = vsel %vm158, %v169, %v171
    %v173 = vshll.u32 %v133, 8
    %v174 = vmul.u32.u64.compose %v173, %v172
    %v175 = vextract.low.u32 %v174
    %v176 = vextract.high.u32 %v174
    %v177 = vmul.u32.u64.compose %v173, %v168
    %v178 = vextract.low.u32 %v177
    %v179 = vextract.high.u32 %v177
    %v180 = vmul.u32 %v173, %v164
    %v181 = vadd.s32 %v176, %v178
    %vm182 = vc.u32 %v176, %v178
    %v183 = vadd.s32 %v179, 1
    %v184 = vsel %vm182, %v183, %v179
    %v185 = vadd.s32 %v180, %v184
    %v186 = vadd.s32 %v185, 536870912
    %v187 = vshrl.u32 %v186, 30
    %v188 = vshll.u32 %v187, 30
    %v189 = vsub.s32 %v185, %v188
    %vm190 = vcmp.lt.s32.totalorder %v189, 0
    %v191 = vsub.s32 0, %v189
    %v192 = vsel %vm190, %v191, %v189
    %v193 = vclz %v192
    %v194 = vsub.s32 %v193, 2
    %vm195 = vcmp.gt.s32.totalorder 0, %v194
    %v196 = vsel %vm195, 0, %v194
    %v197 = vsub.s32 32, %v196
    %v198 = vshll.u32 %v189, %v196
    %v199 = vshrl.u32 %v181, %v197
    %v200 = vor.u32 %v198, %v199
    %v201 = vsub.s32 4294967266, %v196
    %v202 = vadd.s32 %v201, 127
    %v203 = vshll.u32 %v202, 23
    %v204 = vor.u32 4788187, %v203
    %v205 = vand.u32 2147483647, %v204
    %v207 = vcvt.s32.f32 %v200
    %v208 = vmul.f32 %v207, %v205
    %v209 = vxor.u32 %v208, 2147483648
    %v210 = vsel %vm127, %v209, %v208
    %v211 = vsub.s32 4, %v187
    %v212 = vsel %vm127, %v211, %v187
    %v213 = vsel %vm126, %v122, %v210
    %v214 = vsel %vm126, 0, %v212
    %v215 = vcosq.f32.pop %v213
    %v216 = vsinq.f32.pop %v213
    %vm217 = vweird.f32 %v122
    %v218 = vadd.s32 %v214, 3
    %v219 = vand.u32 %v218, 3
    %vm220 = vcmp.lt.s32.totalorder %v219, 2
    %vm221 = vcmp.eq.s32.totalorder %v219, 0
    %v222 = vxor.u32 %v216, 2147483648
    %v223 = vsel %vm221, %v215, %v222
    %vm224 = vcmp.eq.s32.totalorder %v219, 2
    %v225 = vxor.u32 %v215, 2147483648
    %v226 = vsel %vm224, %v225, %v216
    %v227 = vsel %vm220, %v223, %v226
    %v228 = vsel %vm217, nan, %v227
    %229 = vst [vmem:[#allocation7] sm:$0xf] %v228
    // Predicated region
    $region22: #{tpu_custom_call.1} parent=1 // pred_check
      _
    $region23: #{tpu_custom_call.1} parent=1 // pred_check_branch
      %231 = sbr.rel (0) target = $region25
    $region24: #{tpu_custom_call.1} parent=1 // pred_region
      %s233 = ssub.s32 64, 64
      %234 = vsyncadd [#allocation4], %s233
      %s236 = sshll.u32 [#allocation7], 4
      %s237 = int_to_ptr.vmem [resolvable:$true] %s236
      %239 = dma.vmem_to_hbm [thread:$0]  %s237, 64, %s3, [#allocation4]
    $region25: #{tpu_custom_call.1} parent=1 // pred_fallthru
      _
    // Predicated region
    $region26: #{tpu_custom_call.1} parent=1 // pred_check
      _
    $region27: #{tpu_custom_call.1} parent=1 // pred_check_branch
      %241 = sbr.rel (0) target = $region29
    $region28: #{tpu_custom_call.1} parent=1 // pred_region
      %242 = dma.done [#allocation4], 64
    $region29: #{tpu_custom_call.1} parent=1 // pred_fallthru
      _
    %243 = vsyncpa [#allocation3], 1
    %244 = vsyncpa [#allocation6], 1
    %245 = vsyncpa [#allocation4], 1

</llo_original>
